<compile_context>
chip_gen: v5e
topology: v5e:2x2
jax: 0.10.0
libtpu: 0.0.40
codegen_flags: <defaults>
</compile_context>

<pallas_src>
import jax
import jax.numpy as jnp
from jax.experimental import pallas as pl
from jax.experimental.pallas import tpu as pltpu


def _round_up(x, m):
    return (x + m - 1) // m * m


def sent_encoder_kernel(x_ref, w1_ref, b1_ref, w2_ref, b2_ref,
                        wo_ref, bo_ref, out_ref):
    """Fused MLP head: two ReLU linears + fused (mu||logvar) projection.

    Weights and x arrive as bf16; all dots accumulate in f32, bias add / ReLU
    stay in f32 (v5e-safe VPU).
    """
    x = x_ref[...].astype(jnp.bfloat16)                        # no-op if bf16 input

    # fc1 + ReLU
    h1 = jnp.dot(x, w1_ref[...], preferred_element_type=jnp.float32)
    h1 = jnp.maximum(h1 + b1_ref[...], 0.0)

    # fc2 + ReLU
    h2 = jnp.dot(h1.astype(jnp.bfloat16), w2_ref[...],
                 preferred_element_type=jnp.float32)
    h2 = jnp.maximum(h2 + b2_ref[...], 0.0)

    # fused fc_mu || fc_logvar (no activation), lane-dense (TB, 128) store
    out_ref[...] = jnp.dot(h2.astype(jnp.bfloat16), wo_ref[...],
                           preferred_element_type=jnp.float32) + bo_ref[...]


def pack_sent_encoder_params(params):
    """Pack / pad / cast parameters ONCE (hoisted out of the per-call hot path).

    params: dict with w1, b1, w2, b2, w_mu, b_mu, w_logvar, b_logvar;
            weights stored as (in, out), biases as (out,).
    """
    enc_dim, h_dim = params["w1"].shape
    z_dim = params["w_mu"].shape[1]
    hp = _round_up(h_dim, 128)            # lane-dense hidden width (zero-padded)
    out_w = _round_up(2 * z_dim, 128)     # lane-dense fused output width

    def pad2(a, rows, cols):
        return jnp.pad(a, ((0, rows - a.shape[0]), (0, cols - a.shape[1])))

    w1 = pad2(params["w1"], enc_dim, hp).astype(jnp.bfloat16)
    b1 = jnp.pad(params["b1"], (0, hp - h_dim)).reshape(1, hp).astype(jnp.float32)
    w2 = pad2(params["w2"], hp, hp).astype(jnp.bfloat16)
    b2 = jnp.pad(params["b2"], (0, hp - h_dim)).reshape(1, hp).astype(jnp.float32)

    # Fuse the two z_dim-wide projections into one (hp, out_w) matmul.
    w_out = jnp.concatenate([params["w_mu"], params["w_logvar"]], axis=1)
    w_out = pad2(w_out, hp, out_w).astype(jnp.bfloat16)
    b_out = jnp.pad(jnp.concatenate([params["b_mu"], params["b_logvar"]]),
                    (0, out_w - 2 * z_dim)).reshape(1, out_w).astype(jnp.float32)

    return dict(w1=w1, b1=b1, w2=w2, b2=b2, w_out=w_out, b_out=b_out,
                enc_dim=int(enc_dim), h_dim=int(h_dim), z_dim=int(z_dim),
                hp=int(hp), out_w=int(out_w))


def sent_encoder_forward(last_hidden, packed, *,
                         tb_max=2048, vmem_limit_bytes=48 * 1024 * 1024):
    """Run the fused Pallas kernel.

    last_hidden: (B, enc_dim), any float dtype (bf16 preferred, f32 accepted)
    packed: output of pack_sent_encoder_params()
    Returns (q_mu, q_logvar): each (B, z_dim) float32.
    """
    B, enc_dim = last_hidden.shape
    assert enc_dim == packed["enc_dim"]
    hp, out_w, z_dim = packed["hp"], packed["out_w"], packed["z_dim"]

    # Mem-bound on streaming x -> feed it in bf16 (no-op if already bf16).
    x = last_hidden if last_hidden.dtype == jnp.bfloat16 \
        else last_hidden.astype(jnp.bfloat16)

    # --- batch tiling (no zero-pad; ragged final block handled by Pallas) ----
    # >=2 grid steps when B>16 so the "parallel" axis shards across v7x's 2 TCs.
    if B <= 16:
        n_tiles = 1
    else:
        n_tiles = max(2, pl.cdiv(B, tb_max))
    TB = min(_round_up(pl.cdiv(B, n_tiles), 16), tb_max)   # 16-sublane bf16 tiles
    grid = (pl.cdiv(B, TB),)

    flops = 2 * B * (enc_dim * hp + hp * hp + hp * out_w)
    bytes_accessed = (x.size * x.dtype.itemsize
                      + sum(packed[k].size * packed[k].dtype.itemsize
                            for k in ("w1", "b1", "w2", "b2", "w_out", "b_out"))
                      + B * out_w * 4)

    out = pl.pallas_call(
        sent_encoder_kernel,
        grid=grid,
        in_specs=[
            pl.BlockSpec((TB, enc_dim), lambda i: (i, 0)),     # x: tiled over batch
            pl.BlockSpec((enc_dim, hp), lambda i: (0, 0)),     # w1: VMEM-resident
            pl.BlockSpec((1, hp), lambda i: (0, 0)),           # b1
            pl.BlockSpec((hp, hp), lambda i: (0, 0)),          # w2
            pl.BlockSpec((1, hp), lambda i: (0, 0)),           # b2
            pl.BlockSpec((hp, out_w), lambda i: (0, 0)),       # w_mu || w_logvar
            pl.BlockSpec((1, out_w), lambda i: (0, 0)),        # b_mu || b_logvar
        ],
        out_specs=pl.BlockSpec((TB, out_w), lambda i: (i, 0)),
        out_shape=jax.ShapeDtypeStruct((B, out_w), jnp.float32),
        compiler_params=pltpu.CompilerParams(
            dimension_semantics=("parallel",),
            vmem_limit_bytes=vmem_limit_bytes),
        cost_estimate=pl.CostEstimate(flops=flops, transcendentals=0,
                                      bytes_accessed=bytes_accessed),
    )(x, packed["w1"], packed["b1"], packed["w2"], packed["b2"],
      packed["w_out"], packed["b_out"])

    q_mu = out[:, :z_dim]
    q_logvar = out[:, z_dim:2 * z_dim]
    return q_mu, q_logvar


def init_params(key, enc_dim, h_dim, z_dim):
    """Deterministic synthetic parameters (PyTorch Linear init, pre-transposed to (in, out))."""
    ks = jax.random.split(key, 8)

    def linear(kw, kb, fan_in, fan_out):
        bound = 1.0 / jnp.sqrt(jnp.float32(fan_in))
        w = jax.random.uniform(kw, (fan_in, fan_out), jnp.float32, -bound, bound)
        b = jax.random.uniform(kb, (fan_out,), jnp.float32, -bound, bound)
        return w, b

    w1, b1 = linear(ks[0], ks[1], enc_dim, h_dim)
    w2, b2 = linear(ks[2], ks[3], h_dim, h_dim)
    w_mu, b_mu = linear(ks[4], ks[5], h_dim, z_dim)
    w_lv, b_lv = linear(ks[6], ks[7], h_dim, z_dim)
    return dict(w1=w1, b1=b1, w2=w2, b2=b2,
                w_mu=w_mu, b_mu=b_mu, w_logvar=w_lv, b_logvar=b_lv)


def reference_forward(x, p):
    h1 = jax.nn.relu(x @ p["w1"] + p["b1"])
    h2 = jax.nn.relu(h1 @ p["w2"] + p["b2"])
    return h2 @ p["w_mu"] + p["b_mu"], h2 @ p["w_logvar"] + p["b_logvar"]


if __name__ == "__main__":
    # encoder='bert' -> enc_dim=768; small h_dim / z_dim / batch for the demo.
    B, ENC_DIM, H_DIM, Z_DIM = 16, 768, 32, 8

    key = jax.random.PRNGKey(0)
    k_x, k_p = jax.random.split(key)

    last_hidden = jax.random.normal(k_x, (B, ENC_DIM), jnp.float32)
    params = init_params(k_p, ENC_DIM, H_DIM, Z_DIM)

    packed = pack_sent_encoder_params(params)   # once, outside the hot path

    mu, logvar = sent_encoder_forward(last_hidden, packed)
    jax.block_until_ready((mu, logvar))

    mu_ref, lv_ref = reference_forward(last_hidden, params)
    # Tolerance reflects bf16 weight/activation quantization (f32 accumulation).
    assert mu.shape == (B, Z_DIM) and logvar.shape == (B, Z_DIM)
    assert jnp.allclose(mu, mu_ref, atol=2e-2, rtol=2e-2)
    assert jnp.allclose(logvar, lv_ref, atol=2e-2, rtol=2e-2)

    print("KERNEL_OK")
</pallas_src>

<mosaic_0001>
module attributes {stable_mosaic.version = 11 : i64} {
  func.func @sent_encoder_kernel(%arg0: i32, %arg1: memref<16x768xbf16, #tpu.memory_space<vmem>>, %arg2: memref<768x128xbf16, #tpu.memory_space<vmem>>, %arg3: memref<1x128xf32, #tpu.memory_space<vmem>>, %arg4: memref<128x128xbf16, #tpu.memory_space<vmem>>, %arg5: memref<1x128xf32, #tpu.memory_space<vmem>>, %arg6: memref<128x128xbf16, #tpu.memory_space<vmem>>, %arg7: memref<1x128xf32, #tpu.memory_space<vmem>>, %arg8: memref<16x128xf32, #tpu.memory_space<vmem>>) attributes {dimension_semantics = [#tpu.dimension_semantics<parallel>], iteration_bounds = array<i64: 1>, scalar_prefetch = 0 : i64, scratch_operands = 0 : i64, tpu.core_type = #tpu.core_type<tc>, window_params = [{transform_indices = @transform_0, window_bounds = array<i64: 16, 768>}, {pipeline_mode = #tpu.pipeline_mode<synchronous>, transform_indices = @transform_1, window_bounds = array<i64: 768, 128>}, {pipeline_mode = #tpu.pipeline_mode<synchronous>, transform_indices = @transform_2, window_bounds = array<i64: 1, 128>}, {pipeline_mode = #tpu.pipeline_mode<synchronous>, transform_indices = @transform_3, window_bounds = array<i64: 128, 128>}, {pipeline_mode = #tpu.pipeline_mode<synchronous>, transform_indices = @transform_4, window_bounds = array<i64: 1, 128>}, {pipeline_mode = #tpu.pipeline_mode<synchronous>, transform_indices = @transform_5, window_bounds = array<i64: 128, 128>}, {pipeline_mode = #tpu.pipeline_mode<synchronous>, transform_indices = @transform_6, window_bounds = array<i64: 1, 128>}, {transform_indices = @transform_7, window_bounds = array<i64: 16, 128>}]} {
    %c0 = arith.constant 0 : index
    %c0_0 = arith.constant 0 : index
    %0 = vector.load %arg1[%c0, %c0_0] : memref<16x768xbf16, #tpu.memory_space<vmem>>, vector<16x768xbf16>
    %c0_1 = arith.constant 0 : index
    %c0_2 = arith.constant 0 : index
    %1 = vector.load %arg2[%c0_1, %c0_2] : memref<768x128xbf16, #tpu.memory_space<vmem>>, vector<768x128xbf16>
    %cst = arith.constant dense<0.000000e+00> : vector<16x128xf32>
    %2 = tpu.matmul %0, %1, %cst {dimension_numbers = #tpu.dot_dimension_numbers<[1], [0], [0], [1], [0, 0, 1, 1], [], []>} : vector<16x768xbf16>, vector<768x128xbf16>, vector<16x128xf32> -> vector<16x128xf32>
    %c0_3 = arith.constant 0 : index
    %c0_4 = arith.constant 0 : index
    %3 = vector.load %arg3[%c0_3, %c0_4] : memref<1x128xf32, #tpu.memory_space<vmem>>, vector<1x128xf32>
    %4 = vector.broadcast %3 : vector<1x128xf32> to vector<16x128xf32>
    %5 = arith.addf %2, %4 : vector<16x128xf32>
    %cst_5 = arith.constant 0.000000e+00 : f32
    %6 = vector.broadcast %cst_5 : f32 to vector<16x128xf32>
    %7 = arith.maximumf %5, %6 : vector<16x128xf32>
    %8 = arith.truncf %7 : vector<16x128xf32> to vector<16x128xbf16>
    %c0_6 = arith.constant 0 : index
    %c0_7 = arith.constant 0 : index
    %9 = vector.load %arg4[%c0_6, %c0_7] : memref<128x128xbf16, #tpu.memory_space<vmem>>, vector<128x128xbf16>
    %cst_8 = arith.constant dense<0.000000e+00> : vector<16x128xf32>
    %10 = tpu.matmul %8, %9, %cst_8 {dimension_numbers = #tpu.dot_dimension_numbers<[1], [0], [0], [1], [0, 0, 1, 1], [], []>} : vector<16x128xbf16>, vector<128x128xbf16>, vector<16x128xf32> -> vector<16x128xf32>
    %c0_9 = arith.constant 0 : index
    %c0_10 = arith.constant 0 : index
    %11 = vector.load %arg5[%c0_9, %c0_10] : memref<1x128xf32, #tpu.memory_space<vmem>>, vector<1x128xf32>
    %12 = vector.broadcast %11 : vector<1x128xf32> to vector<16x128xf32>
    %13 = arith.addf %10, %12 : vector<16x128xf32>
    %cst_11 = arith.constant 0.000000e+00 : f32
    %14 = vector.broadcast %cst_11 : f32 to vector<16x128xf32>
    %15 = arith.maximumf %13, %14 : vector<16x128xf32>
    %16 = arith.truncf %15 : vector<16x128xf32> to vector<16x128xbf16>
    %c0_12 = arith.constant 0 : index
    %c0_13 = arith.constant 0 : index
    %17 = vector.load %arg6[%c0_12, %c0_13] : memref<128x128xbf16, #tpu.memory_space<vmem>>, vector<128x128xbf16>
    %cst_14 = arith.constant dense<0.000000e+00> : vector<16x128xf32>
    %18 = tpu.matmul %16, %17, %cst_14 {dimension_numbers = #tpu.dot_dimension_numbers<[1], [0], [0], [1], [0, 0, 1, 1], [], []>} : vector<16x128xbf16>, vector<128x128xbf16>, vector<16x128xf32> -> vector<16x128xf32>
    %c0_15 = arith.constant 0 : index
    %c0_16 = arith.constant 0 : index
    %19 = vector.load %arg7[%c0_15, %c0_16] : memref<1x128xf32, #tpu.memory_space<vmem>>, vector<1x128xf32>
    %20 = vector.broadcast %19 : vector<1x128xf32> to vector<16x128xf32>
    %21 = arith.addf %18, %20 : vector<16x128xf32>
    %c0_17 = arith.constant 0 : index
    %c0_18 = arith.constant 0 : index
    %22 = vector.load %arg8[%c0_17, %c0_18] : memref<16x128xf32, #tpu.memory_space<vmem>>, vector<16x128xf32>
    tpu.vector_store %arg8[%c0_17, %c0_18], %21 {strides = array<i32>} : memref<16x128xf32, #tpu.memory_space<vmem>>, vector<16x128xf32>,
    return
  }
  func.func @transform_0(%arg0: i32) -> (i32, i32) {
    %c0_i32 = arith.constant 0 : i32
    %c0_i32_0 = arith.constant 0 : i32
    return %arg0, %c0_i32 : i32, i32
  }
  func.func @transform_1(%arg0: i32) -> (i32, i32) {
    %c0_i32 = arith.constant 0 : i32
    %c0_i32_0 = arith.constant 0 : i32
    %c0_i32_1 = arith.constant 0 : i32
    return %c0_i32, %c0_i32_0 : i32, i32
  }
  func.func @transform_2(%arg0: i32) -> (i32, i32) {
    %c0_i32 = arith.constant 0 : i32
    %c0_i32_0 = arith.constant 0 : i32
    %c0_i32_1 = arith.constant 0 : i32
    return %c0_i32, %c0_i32_0 : i32, i32
  }
  func.func @transform_3(%arg0: i32) -> (i32, i32) {
    %c0_i32 = arith.constant 0 : i32
    %c0_i32_0 = arith.constant 0 : i32
    %c0_i32_1 = arith.constant 0 : i32
    return %c0_i32, %c0_i32_0 : i32, i32
  }
  func.func @transform_4(%arg0: i32) -> (i32, i32) {
    %c0_i32 = arith.constant 0 : i32
    %c0_i32_0 = arith.constant 0 : i32
    %c0_i32_1 = arith.constant 0 : i32
    return %c0_i32, %c0_i32_0 : i32, i32
  }
  func.func @transform_5(%arg0: i32) -> (i32, i32) {
    %c0_i32 = arith.constant 0 : i32
    %c0_i32_0 = arith.constant 0 : i32
    %c0_i32_1 = arith.constant 0 : i32
    return %c0_i32, %c0_i32_0 : i32, i32
  }
  func.func @transform_6(%arg0: i32) -> (i32, i32) {
    %c0_i32 = arith.constant 0 : i32
    %c0_i32_0 = arith.constant 0 : i32
    %c0_i32_1 = arith.constant 0 : i32
    return %c0_i32, %c0_i32_0 : i32, i32
  }
  func.func @transform_7(%arg0: i32) -> (i32, i32) {
    %c0_i32 = arith.constant 0 : i32
    %c0_i32_0 = arith.constant 0 : i32
    return %arg0, %c0_i32 : i32, i32
  }
}

</mosaic_0001>

<llo_original>
// kernel: tpu_custom_call.1
$region0: #{tpu_custom_call.1}
  #allocation0 [shape = 'u32[]', space=smem, size = 0x4, offset = 0x4, fixed_abs, tag = 'smem constant byte address 0x4 - core index']
  #allocation1 [shape = 'u32[72,128]{1,0:T(1,128)}', space=vmem, size = 0x9000, scoped, tag = 'internal scratch']
  %s0 = inlined_call_operand.hbm [shape: bf16[16,768], index: 0, kind: input, shape index: {}]
  %s1 = inlined_call_operand.hbm [shape: bf16[768,128], index: 1, kind: input, shape index: {}]
  %s2 = inlined_call_operand.vmem [shape: f32[1,128], index: 2, kind: input, shape index: {}]
  %s3 = inlined_call_operand.hbm [shape: bf16[128,128], index: 3, kind: input, shape index: {}]
  %s4 = inlined_call_operand.vmem [shape: f32[1,128], index: 4, kind: input, shape index: {}]
  %s5 = inlined_call_operand.hbm [shape: bf16[128,128], index: 5, kind: input, shape index: {}]
  %s6 = inlined_call_operand.vmem [shape: f32[1,128], index: 6, kind: input, shape index: {}]
  %s7 = inlined_call_operand.hbm [shape: f32[16,128], index: 7, kind: output, shape index: {}]
  %s8 = sld [smem:[#allocation0]]
  $region54: #{tpu_custom_call.1} parent=0
    _
  %s10 = ssub.s32 1, %s8
  %s11 = scalar_select 0, %s10, %s8
  $region1: #{tpu_custom_call.1} parent=0
    #allocation2 [shape = 'u8[24576]{0}', space=vmem, size = 0x6000, scoped, tag = 'input window, operand 0, single buffered']
    #allocation3 [shape = 's32[1]{0}', space=sflag, size = 0x4, scoped, tag = 'scoped memory for tpu_custom_call.1']
    #allocation4 [shape = 's32[1]{0}', space=sflag, size = 0x4, scoped, tag = 'scoped memory for tpu_custom_call.1']
    #allocation5 [shape = 'u8[196608]{0}', space=vmem, size = 0x30000, scoped, tag = 'input window, operand 1, single buffered']
    #allocation6 [shape = 's32[1]{0}', space=sflag, size = 0x4, scoped, tag = 'scoped memory for tpu_custom_call.1']
    #allocation7 [shape = 'u8[32768]{0}', space=vmem, size = 0x8000, scoped, tag = 'input window, operand 3, single buffered']
    #allocation8 [shape = 'u8[32768]{0}', space=vmem, size = 0x8000, scoped, tag = 'input window, operand 5, single buffered']
    #allocation9 [shape = 's32[1]{0}', space=sflag, size = 0x4, scoped, tag = 'scoped memory for tpu_custom_call.1']
    #allocation10 [shape = 'u8[8192]{0}', space=vmem, size = 0x2000, scoped, tag = 'output window, operand 0, single buffered']
    %12 = vsyncpa [#allocation3], 0
    %13 = vsyncpa [#allocation6], 0
    %14 = vsyncpa [#allocation9], 0
    %15 = vsyncpa [#allocation4], 0
    // Predicated region
    $region2: #{tpu_custom_call.1} parent=1 // pred_check
      _
    $region3: #{tpu_custom_call.1} parent=1 // pred_check_branch
      %17 = sbr.rel (0) target = $region5
    $region4: #{tpu_custom_call.1} parent=1 // pred_region
      %19 = vsyncadd [#allocation3], 0
      %s20 = sshll.u32 %s0, 4
      %s21 = int_to_ptr.hbm [resolvable:$true] %s20
      %s22 = sshll.u32 [#allocation2], 4
      %s23 = int_to_ptr.vmem [resolvable:$true] %s22
      %28 = dma.hbm_to_vmem [thread:$0]  %s21, 768, %s23, [#allocation3], 384, 384, 24
    $region5: #{tpu_custom_call.1} parent=1 // pred_fallthru
      _
    // Predicated region
    $region6: #{tpu_custom_call.1} parent=1 // pred_check
      _
    $region7: #{tpu_custom_call.1} parent=1 // pred_check_branch
      %30 = sbr.rel (0) target = $region9
    $region8: #{tpu_custom_call.1} parent=1 // pred_region
      %32 = vsyncadd [#allocation6], 0
      %s33 = sshll.u32 %s1, 4
      %s34 = int_to_ptr.hbm [resolvable:$true] %s33
      %s35 = sshll.u32 [#allocation5], 4
      %s36 = int_to_ptr.vmem [resolvable:$true] %s35
      %41 = dma.hbm_to_vmem [thread:$0]  %s34, 6144, %s36, [#allocation6], 64, 64, 4
    $region9: #{tpu_custom_call.1} parent=1 // pred_fallthru
      _
    // Predicated region
    $region10: #{tpu_custom_call.1} parent=1 // pred_check
      _
    $region11: #{tpu_custom_call.1} parent=1 // pred_check_branch
      %43 = sbr.rel (0) target = $region13
    $region12: #{tpu_custom_call.1} parent=1 // pred_region
      _
    $region13: #{tpu_custom_call.1} parent=1 // pred_fallthru
      _
    // Predicated region
    $region14: #{tpu_custom_call.1} parent=1 // pred_check
      _
    $region15: #{tpu_custom_call.1} parent=1 // pred_check_branch
      %45 = sbr.rel (0) target = $region17
    $region16: #{tpu_custom_call.1} parent=1 // pred_region
      %47 = vsyncadd [#allocation6], 0
      %s48 = sshll.u32 %s3, 4
      %s49 = int_to_ptr.hbm [resolvable:$true] %s48
      %s50 = sshll.u32 [#allocation7], 4
      %s51 = int_to_ptr.vmem [resolvable:$true] %s50
      %56 = dma.hbm_to_vmem [thread:$0]  %s49, 1024, %s51, [#allocation6], 64, 64, 4
    $region17: #{tpu_custom_call.1} parent=1 // pred_fallthru
      _
    // Predicated region
    $region18: #{tpu_custom_call.1} parent=1 // pred_check
      _
    $region19: #{tpu_custom_call.1} parent=1 // pred_check_branch
      %58 = sbr.rel (0) target = $region21
    $region20: #{tpu_custom_call.1} parent=1 // pred_region
      _
    $region21: #{tpu_custom_call.1} parent=1 // pred_fallthru
      _
    // Predicated region
    $region22: #{tpu_custom_call.1} parent=1 // pred_check
      _
    $region23: #{tpu_custom_call.1} parent=1 // pred_check_branch
      %60 = sbr.rel (0) target = $region25
    $region24: #{tpu_custom_call.1} parent=1 // pred_region
      %62 = vsyncadd [#allocation9], 0
      %s63 = sshll.u32 %s5, 4
      %s64 = int_to_ptr.hbm [resolvable:$true] %s63
      %s65 = sshll.u32 [#allocation8], 4
      %s66 = int_to_ptr.vmem [resolvable:$true] %s65
      %71 = dma.hbm_to_vmem [thread:$0]  %s64, 1024, %s66, [#allocation9], 64, 64, 4
    $region25: #{tpu_custom_call.1} parent=1 // pred_fallthru
      _
    // Predicated region
    $region26: #{tpu_custom_call.1} parent=1 // pred_check
      _
    $region27: #{tpu_custom_call.1} parent=1 // pred_check_branch
      %73 = sbr.rel (0) target = $region29
    $region28: #{tpu_custom_call.1} parent=1 // pred_region
      _
    $region29: #{tpu_custom_call.1} parent=1 // pred_fallthru
      _
    // Predicated region
    $region30: #{tpu_custom_call.1} parent=1 // pred_check
      _
    $region31: #{tpu_custom_call.1} parent=1 // pred_check_branch
      %75 = sbr.rel (0) target = $region33
    $region32: #{tpu_custom_call.1} parent=1 // pred_region
      %77 = dma.done [#allocation3], 768
    $region33: #{tpu_custom_call.1} parent=1 // pred_fallthru
      _
    // Predicated region
    $region34: #{tpu_custom_call.1} parent=1 // pred_check
      _
    $region35: #{tpu_custom_call.1} parent=1 // pred_check_branch
      %79 = sbr.rel (0) target = $region37
    $region36: #{tpu_custom_call.1} parent=1 // pred_region
      %81 = dma.done [#allocation6], 6144
    $region37: #{tpu_custom_call.1} parent=1 // pred_fallthru
      _
    // Predicated region
    $region38: #{tpu_custom_call.1} parent=1 // pred_check
      _
    $region39: #{tpu_custom_call.1} parent=1 // pred_check_branch
      %83 = sbr.rel (0) target = $region41
    $region40: #{tpu_custom_call.1} parent=1 // pred_region
      %85 = dma.done [#allocation6], 1024
    $region41: #{tpu_custom_call.1} parent=1 // pred_fallthru
      _
    // Predicated region
    $region42: #{tpu_custom_call.1} parent=1 // pred_check
      _
    $region43: #{tpu_custom_call.1} parent=1 // pred_check_branch
      %87 = sbr.rel (0) target = $region45
    $region44: #{tpu_custom_call.1} parent=1 // pred_region
      %89 = dma.done [#allocation9], 1024
    $region45: #{tpu_custom_call.1} parent=1 // pred_fallthru
      _
    %v90 = vld [vmem:[#allocation2] sm:$0xff]
    %v91 = vld [vmem:[#allocation2 + $0x8] sm:$0xff]
    %v92 = vld [vmem:[#allocation2 + $0x10] sm:$0xff]
    %v93 = vld [vmem:[#allocation2 + $0x18] sm:$0xff]
    %v94 = vld [vmem:[#allocation2 + $0x20] sm:$0xff]
    %v95 = vld [vmem:[#allocation2 + $0x28] sm:$0xff]
    %v96 = vld [vmem:[#allocation5] sm:$0xf]
    %v97 = vld [vmem:[#allocation5 + $0x4] sm:$0xf]
    %v98 = vld [vmem:[#allocation5 + $0x8] sm:$0xf]
    %v99 = vld [vmem:[#allocation5 + $0xc] sm:$0xf]
    %v100 = vld [vmem:[#allocation5 + $0x10] sm:$0xf]
    %v101 = vld [vmem:[#allocation5 + $0x14] sm:$0xf]
    %v102 = vld [vmem:[#allocation5 + $0x18] sm:$0xf]
    %v103 = vld [vmem:[#allocation5 + $0x1c] sm:$0xf]
    %v104 = vld [vmem:[#allocation5 + $0x20] sm:$0xf]
    %v105 = vld [vmem:[#allocation5 + $0x24] sm:$0xf]
    %v106 = vld [vmem:[#allocation5 + $0x28] sm:$0xf]
    %v107 = vld [vmem:[#allocation5 + $0x2c] sm:$0xf]
    %v108 = vld [vmem:[#allocation5 + $0x30] sm:$0xf]
    %v109 = vld [vmem:[#allocation5 + $0x34] sm:$0xf]
    %v110 = vld [vmem:[#allocation5 + $0x38] sm:$0xf]
    %v111 = vld [vmem:[#allocation5 + $0x3c] sm:$0xf]
    %v112 = vld [vmem:[#allocation5 + $0x40] sm:$0xf]
    %v113 = vld [vmem:[#allocation5 + $0x44] sm:$0xf]
    %v114 = vld [vmem:[#allocation5 + $0x48] sm:$0xf]
    %v115 = vld [vmem:[#allocation5 + $0x4c] sm:$0xf]
    %v116 = vld [vmem:[#allocation5 + $0x50] sm:$0xf]
    %v117 = vld [vmem:[#allocation5 + $0x54] sm:$0xf]
    %v118 = vld [vmem:[#allocation5 + $0x58] sm:$0xf]
    %v119 = vld [vmem:[#allocation5 + $0x5c] sm:$0xf]
    %v120 = vld [vmem:[#allocation5 + $0x60] sm:$0xf]
    %v121 = vld [vmem:[#allocation5 + $0x64] sm:$0xf]
    %v122 = vld [vmem:[#allocation5 + $0x68] sm:$0xf]
    %v123 = vld [vmem:[#allocation5 + $0x6c] sm:$0xf]
    %v124 = vld [vmem:[#allocation5 + $0x70] sm:$0xf]
    %v125 = vld [vmem:[#allocation5 + $0x74] sm:$0xf]
    %v126 = vld [vmem:[#allocation5 + $0x78] sm:$0xf]
    %v127 = vld [vmem:[#allocation5 + $0x7c] sm:$0xf]
    %v128 = vld [vmem:[#allocation5 + $0x80] sm:$0xf]
    %v129 = vld [vmem:[#allocation5 + $0x84] sm:$0xf]
    %v130 = vld [vmem:[#allocation5 + $0x88] sm:$0xf]
    %v131 = vld [vmem:[#allocation5 + $0x8c] sm:$0xf]
    %v132 = vld [vmem:[#allocation5 + $0x90] sm:$0xf]
    %v133 = vld [vmem:[#allocation5 + $0x94] sm:$0xf]
    %v134 = vld [vmem:[#allocation5 + $0x98] sm:$0xf]
    %v135 = vld [vmem:[#allocation5 + $0x9c] sm:$0xf]
    %v136 = vld [vmem:[#allocation5 + $0xa0] sm:$0xf]
    %v137 = vld [vmem:[#allocation5 + $0xa4] sm:$0xf]
    %v138 = vld [vmem:[#allocation5 + $0xa8] sm:$0xf]
    %v139 = vld [vmem:[#allocation5 + $0xac] sm:$0xf]
    %v140 = vld [vmem:[#allocation5 + $0xb0] sm:$0xf]
    %v141 = vld [vmem:[#allocation5 + $0xb4] sm:$0xf]
    %v142 = vld [vmem:[#allocation5 + $0xb8] sm:$0xf]
    %v143 = vld [vmem:[#allocation5 + $0xbc] sm:$0xf]
    %v144 = vld [vmem:[#allocation5 + $0xc0] sm:$0xf]
    %v145 = vld [vmem:[#allocation5 + $0xc4] sm:$0xf]
    %v146 = vld [vmem:[#allocation5 + $0xc8] sm:$0xf]
    %v147 = vld [vmem:[#allocation5 + $0xcc] sm:$0xf]
    %v148 = vld [vmem:[#allocation5 + $0xd0] sm:$0xf]
    %v149 = vld [vmem:[#allocation5 + $0xd4] sm:$0xf]
    %v150 = vld [vmem:[#allocation5 + $0xd8] sm:$0xf]
    %v151 = vld [vmem:[#allocation5 + $0xdc] sm:$0xf]
    %v152 = vld [vmem:[#allocation5 + $0xe0] sm:$0xf]
    %v153 = vld [vmem:[#allocation5 + $0xe4] sm:$0xf]
    %v154 = vld [vmem:[#allocation5 + $0xe8] sm:$0xf]
    %v155 = vld [vmem:[#allocation5 + $0xec] sm:$0xf]
    %v156 = vld [vmem:[#allocation5 + $0xf0] sm:$0xf]
    %v157 = vld [vmem:[#allocation5 + $0xf4] sm:$0xf]
    %v158 = vld [vmem:[#allocation5 + $0xf8] sm:$0xf]
    %v159 = vld [vmem:[#allocation5 + $0xfc] sm:$0xf]
    %v160 = vld [vmem:[#allocation5 + $0x100] sm:$0xf]
    %v161 = vld [vmem:[#allocation5 + $0x104] sm:$0xf]
    %v162 = vld [vmem:[#allocation5 + $0x108] sm:$0xf]
    %v163 = vld [vmem:[#allocation5 + $0x10c] sm:$0xf]
    %v164 = vld [vmem:[#allocation5 + $0x110] sm:$0xf]
    %v165 = vld [vmem:[#allocation5 + $0x114] sm:$0xf]
    %v166 = vld [vmem:[#allocation5 + $0x118] sm:$0xf]
    %v167 = vld [vmem:[#allocation5 + $0x11c] sm:$0xf]
    %v168 = vld [vmem:[#allocation5 + $0x120] sm:$0xf]
    %v169 = vld [vmem:[#allocation5 + $0x124] sm:$0xf]
    %v170 = vld [vmem:[#allocation5 + $0x128] sm:$0xf]
    %v171 = vld [vmem:[#allocation5 + $0x12c] sm:$0xf]
    %v172 = vld [vmem:[#allocation5 + $0x130] sm:$0xf]
    %v173 = vld [vmem:[#allocation5 + $0x134] sm:$0xf]
    %v174 = vld [vmem:[#allocation5 + $0x138] sm:$0xf]
    %v175 = vld [vmem:[#allocation5 + $0x13c] sm:$0xf]
    %v176 = vld [vmem:[#allocation5 + $0x140] sm:$0xf]
    %v177 = vld [vmem:[#allocation5 + $0x144] sm:$0xf]
    %v178 = vld [vmem:[#allocation5 + $0x148] sm:$0xf]
    %v179 = vld [vmem:[#allocation5 + $0x14c] sm:$0xf]
    %v180 = vld [vmem:[#allocation5 + $0x150] sm:$0xf]
    %v181 = vld [vmem:[#allocation5 + $0x154] sm:$0xf]
    %v182 = vld [vmem:[#allocation5 + $0x158] sm:$0xf]
    %v183 = vld [vmem:[#allocation5 + $0x15c] sm:$0xf]
    %v184 = vld [vmem:[#allocation5 + $0x160] sm:$0xf]
    %v185 = vld [vmem:[#allocation5 + $0x164] sm:$0xf]
    %v186 = vld [vmem:[#allocation5 + $0x168] sm:$0xf]
    %v187 = vld [vmem:[#allocation5 + $0x16c] sm:$0xf]
    %v188 = vld [vmem:[#allocation5 + $0x170] sm:$0xf]
    %v189 = vld [vmem:[#allocation5 + $0x174] sm:$0xf]
    %v190 = vld [vmem:[#allocation5 + $0x178] sm:$0xf]
    %v191 = vld [vmem:[#allocation5 + $0x17c] sm:$0xf]
    %v192 = vld [vmem:[%s2] sm:$0x1]
    %v194 = vperm.slane %v192, 0
    %v202 = vunpack.c.l.b16 %v90
    %v203 = vunpack.c.h.b16 %v90
    %v204 = vunpack.c.l.b16 %v91
    %v205 = vunpack.c.h.b16 %v91
    %v206 = vunpack.c.l.b16 %v92
    %v207 = vunpack.c.h.b16 %v92
    %v208 = vunpack.c.l.b16 %v93
    %v209 = vunpack.c.h.b16 %v93
    %v210 = vunpack.c.l.b16 %v94
    %v211 = vunpack.c.h.b16 %v94
    %v212 = vunpack.c.l.b16 %v95
    %v213 = vunpack.c.h.b16 %v95
    %v214 = vpack.c.b16 %v208, %v202
    %v215 = vpack.c.b16 %v209, %v203
    %v216 = vpack.c.b16 %v210, %v204
    %v217 = vpack.c.b16 %v211, %v205
    %v218 = vpack.c.b16 %v212, %v206
    %v219 = vpack.c.b16 %v213, %v207
    %v322 = vunpack.c.l.b16 %v96
    %v323 = vunpack.c.l.b16 %v97
    %v324 = vunpack.c.l.b16 %v98
    %v325 = vunpack.c.l.b16 %v99
    %v326 = vunpack.c.l.b16 %v100
    %v327 = vunpack.c.l.b16 %v101
    %v328 = vunpack.c.l.b16 %v102
    %v329 = vunpack.c.l.b16 %v103
    %v330 = vunpack.c.l.b16 %v104
    %v331 = vunpack.c.l.b16 %v105
    %v332 = vunpack.c.l.b16 %v106
    %v333 = vunpack.c.l.b16 %v107
    %v334 = vunpack.c.l.b16 %v108
    %v335 = vunpack.c.l.b16 %v109
    %v336 = vunpack.c.l.b16 %v110
    %v337 = vunpack.c.l.b16 %v111
    %v338 = vunpack.c.l.b16 %v112
    %v339 = vunpack.c.l.b16 %v113
    %v340 = vunpack.c.l.b16 %v114
    %v341 = vunpack.c.l.b16 %v115
    %v342 = vunpack.c.l.b16 %v116
    %v343 = vunpack.c.l.b16 %v117
    %v344 = vunpack.c.l.b16 %v118
    %v345 = vunpack.c.l.b16 %v119
    %v346 = vunpack.c.l.b16 %v120
    %v347 = vunpack.c.l.b16 %v121
    %v348 = vunpack.c.l.b16 %v122
    %v349 = vunpack.c.l.b16 %v123
    %v350 = vunpack.c.l.b16 %v124
    %v351 = vunpack.c.l.b16 %v125
    %v352 = vunpack.c.l.b16 %v126
    %v353 = vunpack.c.l.b16 %v127
    %v354 = vunpack.c.l.b16 %v128
    %v355 = vunpack.c.l.b16 %v129
    %v356 = vunpack.c.l.b16 %v130
    %v357 = vunpack.c.l.b16 %v131
    %v358 = vunpack.c.l.b16 %v132
    %v359 = vunpack.c.l.b16 %v133
    %v360 = vunpack.c.l.b16 %v134
    %v361 = vunpack.c.l.b16 %v135
    %v362 = vunpack.c.l.b16 %v136
    %v363 = vunpack.c.l.b16 %v137
    %v364 = vunpack.c.l.b16 %v138
    %v365 = vunpack.c.l.b16 %v139
    %v366 = vunpack.c.l.b16 %v140
    %v367 = vunpack.c.l.b16 %v141
    %v368 = vunpack.c.l.b16 %v142
    %v369 = vunpack.c.l.b16 %v143
    %v370 = vunpack.c.l.b16 %v144
    %v371 = vunpack.c.l.b16 %v145
    %v372 = vunpack.c.l.b16 %v146
    %v373 = vunpack.c.l.b16 %v147
    %v374 = vunpack.c.l.b16 %v148
    %v375 = vunpack.c.l.b16 %v149
    %v376 = vunpack.c.l.b16 %v150
    %v377 = vunpack.c.l.b16 %v151
    %v378 = vunpack.c.l.b16 %v152
    %v379 = vunpack.c.l.b16 %v153
    %v380 = vunpack.c.l.b16 %v154
    %v381 = vunpack.c.l.b16 %v155
    %v382 = vunpack.c.l.b16 %v156
    %v383 = vunpack.c.l.b16 %v157
    %v384 = vunpack.c.l.b16 %v158
    %v385 = vunpack.c.l.b16 %v159
    %v386 = vunpack.c.l.b16 %v160
    %v387 = vunpack.c.l.b16 %v161
    %v388 = vunpack.c.l.b16 %v162
    %v389 = vunpack.c.l.b16 %v163
    %v390 = vunpack.c.l.b16 %v164
    %v391 = vunpack.c.l.b16 %v165
    %v392 = vunpack.c.l.b16 %v166
    %v393 = vunpack.c.l.b16 %v167
    %v394 = vunpack.c.l.b16 %v168
    %v395 = vunpack.c.l.b16 %v169
    %v396 = vunpack.c.l.b16 %v170
    %v397 = vunpack.c.l.b16 %v171
    %v398 = vunpack.c.l.b16 %v172
    %v399 = vunpack.c.l.b16 %v173
    %v400 = vunpack.c.l.b16 %v174
    %v401 = vunpack.c.l.b16 %v175
    %v402 = vunpack.c.l.b16 %v176
    %v403 = vunpack.c.l.b16 %v177
    %v404 = vunpack.c.l.b16 %v178
    %v405 = vunpack.c.l.b16 %v179
    %v406 = vunpack.c.l.b16 %v180
    %v407 = vunpack.c.l.b16 %v181
    %v408 = vunpack.c.l.b16 %v182
    %v409 = vunpack.c.l.b16 %v183
    %v410 = vunpack.c.l.b16 %v184
    %v411 = vunpack.c.l.b16 %v185
    %v412 = vunpack.c.l.b16 %v186
    %v413 = vunpack.c.l.b16 %v187
    %v414 = vunpack.c.l.b16 %v188
    %v415 = vunpack.c.l.b16 %v189
    %v416 = vunpack.c.l.b16 %v190
    %v417 = vunpack.c.l.b16 %v191
    %v418 = vpack.c.b16 %v323, %v322
    %v419 = vpack.c.b16 %v325, %v324
    %v420 = vpack.c.b16 %v327, %v326
    %v421 = vpack.c.b16 %v329, %v328
    %v422 = vpack.c.b16 %v331, %v330
    %v423 = vpack.c.b16 %v333, %v332
    %v424 = vpack.c.b16 %v335, %v334
    %v425 = vpack.c.b16 %v337, %v336
    %v426 = vpack.c.b16 %v339, %v338
    %v427 = vpack.c.b16 %v341, %v340
    %v428 = vpack.c.b16 %v343, %v342
    %v429 = vpack.c.b16 %v345, %v344
    %v430 = vpack.c.b16 %v347, %v346
    %v431 = vpack.c.b16 %v349, %v348
    %v432 = vpack.c.b16 %v351, %v350
    %v433 = vpack.c.b16 %v353, %v352
    %v434 = vpack.c.b16 %v355, %v354
    %v435 = vpack.c.b16 %v357, %v356
    %v436 = vpack.c.b16 %v359, %v358
    %v437 = vpack.c.b16 %v361, %v360
    %v438 = vpack.c.b16 %v363, %v362
    %v439 = vpack.c.b16 %v365, %v364
    %v440 = vpack.c.b16 %v367, %v366
    %v441 = vpack.c.b16 %v369, %v368
    %v442 = vpack.c.b16 %v371, %v370
    %v443 = vpack.c.b16 %v373, %v372
    %v444 = vpack.c.b16 %v375, %v374
    %v445 = vpack.c.b16 %v377, %v376
    %v446 = vpack.c.b16 %v379, %v378
    %v447 = vpack.c.b16 %v381, %v380
    %v448 = vpack.c.b16 %v383, %v382
    %v449 = vpack.c.b16 %v385, %v384
    %v450 = vpack.c.b16 %v387, %v386
    %v451 = vpack.c.b16 %v389, %v388
    %v452 = vpack.c.b16 %v391, %v390
    %v453 = vpack.c.b16 %v393, %v392
    %v454 = vpack.c.b16 %v395, %v394
    %v455 = vpack.c.b16 %v397, %v396
    %v456 = vpack.c.b16 %v399, %v398
    %v457 = vpack.c.b16 %v401, %v400
    %v458 = vpack.c.b16 %v403, %v402
    %v459 = vpack.c.b16 %v405, %v404
    %v460 = vpack.c.b16 %v407, %v406
    %v461 = vpack.c.b16 %v409, %v408
    %v462 = vpack.c.b16 %v411, %v410
    %v463 = vpack.c.b16 %v413, %v412
    %v464 = vpack.c.b16 %v415, %v414
    %v465 = vpack.c.b16 %v417, %v416
    %514 = vmatpush.bf16.msra.mxu0 %v425
    %515 = vmatpush.bf16.msra.mxu0 %v424
    %516 = vmatpush.bf16.msra.mxu0 %v423
    %517 = vmatpush.bf16.msra.mxu0 %v422
    %518 = vmatpush.bf16.msra.mxu0 %v421
    %519 = vmatpush.bf16.msra.mxu0 %v420
    %520 = vmatpush.bf16.msra.mxu0 %v419
    %521 = vmatpush.bf16.msra.mxu0 %v418
    %522 = vmatmul.bf16.gmra.mxu0 %v214
    %v523 = vpop.f32.mrf.mxu0
    %v524 = vadd.f32 %v194, %v523
    %v525 = vpop.f32.mrf.mxu0
    %v526 = vadd.f32 %v194, %v525
    %527 = vdwg.mxu0
    %528 = vmatpush.bf16.msra.mxu0 %v433
    %529 = vmatpush.bf16.msra.mxu0 %v432
    %530 = vmatpush.bf16.msra.mxu0 %v431
    %531 = vmatpush.bf16.msra.mxu0 %v430
    %532 = vmatpush.bf16.msra.mxu0 %v429
    %533 = vmatpush.bf16.msra.mxu0 %v428
    %534 = vmatpush.bf16.msra.mxu0 %v427
    %535 = vmatpush.bf16.msra.mxu0 %v426
    %536 = vmatmul.bf16.gmra.mxu0 %v215
    %v537 = vpop.f32.mrf.mxu0
    %v538 = vadd.f32 %v524, %v537
    %v539 = vpop.f32.mrf.mxu0
    %v540 = vadd.f32 %v526, %v539
    %541 = vdwg.mxu0
    %542 = vmatpush.bf16.msra.mxu0 %v441
    %543 = vmatpush.bf16.msra.mxu0 %v440
    %544 = vmatpush.bf16.msra.mxu0 %v439
    %545 = vmatpush.bf16.msra.mxu0 %v438
    %546 = vmatpush.bf16.msra.mxu0 %v437
    %547 = vmatpush.bf16.msra.mxu0 %v436
    %548 = vmatpush.bf16.msra.mxu0 %v435
    %549 = vmatpush.bf16.msra.mxu0 %v434
    %550 = vmatmul.bf16.gmra.mxu0 %v216
    %v551 = vpop.f32.mrf.mxu0
    %v552 = vadd.f32 %v538, %v551
    %v553 = vpop.f32.mrf.mxu0
    %v554 = vadd.f32 %v540, %v553
    %555 = vdwg.mxu0
    %556 = vmatpush.bf16.msra.mxu0 %v449
    %557 = vmatpush.bf16.msra.mxu0 %v448
    %558 = vmatpush.bf16.msra.mxu0 %v447
    %559 = vmatpush.bf16.msra.mxu0 %v446
    %560 = vmatpush.bf16.msra.mxu0 %v445
    %561 = vmatpush.bf16.msra.mxu0 %v444
    %562 = vmatpush.bf16.msra.mxu0 %v443
    %563 = vmatpush.bf16.msra.mxu0 %v442
    %564 = vmatmul.bf16.gmra.mxu0 %v217
    %v565 = vpop.f32.mrf.mxu0
    %v566 = vadd.f32 %v552, %v565
    %v567 = vpop.f32.mrf.mxu0
    %v568 = vadd.f32 %v554, %v567
    %569 = vdwg.mxu0
    %570 = vmatpush.bf16.msra.mxu0 %v457
    %571 = vmatpush.bf16.msra.mxu0 %v456
    %572 = vmatpush.bf16.msra.mxu0 %v455
    %573 = vmatpush.bf16.msra.mxu0 %v454
    %574 = vmatpush.bf16.msra.mxu0 %v453
    %575 = vmatpush.bf16.msra.mxu0 %v452
    %576 = vmatpush.bf16.msra.mxu0 %v451
    %577 = vmatpush.bf16.msra.mxu0 %v450
    %578 = vmatmul.bf16.gmra.mxu0 %v218
    %v579 = vpop.f32.mrf.mxu0
    %v580 = vadd.f32 %v566, %v579
    %v581 = vpop.f32.mrf.mxu0
    %v582 = vadd.f32 %v568, %v581
    %583 = vdwg.mxu0
    %584 = vmatpush.bf16.msra.mxu0 %v465
    %585 = vmatpush.bf16.msra.mxu0 %v464
    %586 = vmatpush.bf16.msra.mxu0 %v463
    %587 = vmatpush.bf16.msra.mxu0 %v462
    %588 = vmatpush.bf16.msra.mxu0 %v461
    %589 = vmatpush.bf16.msra.mxu0 %v460
    %590 = vmatpush.bf16.msra.mxu0 %v459
    %591 = vmatpush.bf16.msra.mxu0 %v458
    %592 = vmatmul.bf16.gmra.mxu0 %v219
    %v593 = vpop.f32.mrf.mxu0
    %v594 = vadd.f32 %v580, %v593
    %v595 = vpop.f32.mrf.mxu0
    %v596 = vadd.f32 %v582, %v595
    %597 = vdwg.mxu0
    %v598 = vmax.f32 %v594, 0.0
    %v599 = vmax.f32 %v596, 0.0
    %v600 = vpack.c.bf16 %v599, %v598
    %v601 = vld [vmem:[#allocation7] sm:$0xf]
    %v602 = vld [vmem:[#allocation7 + $0x4] sm:$0xf]
    %v603 = vld [vmem:[#allocation7 + $0x8] sm:$0xf]
    %v604 = vld [vmem:[#allocation7 + $0xc] sm:$0xf]
    %v605 = vld [vmem:[#allocation7 + $0x10] sm:$0xf]
    %v606 = vld [vmem:[#allocation7 + $0x14] sm:$0xf]
    %v607 = vld [vmem:[#allocation7 + $0x18] sm:$0xf]
    %v608 = vld [vmem:[#allocation7 + $0x1c] sm:$0xf]
    %v609 = vld [vmem:[#allocation7 + $0x20] sm:$0xf]
    %v610 = vld [vmem:[#allocation7 + $0x24] sm:$0xf]
    %v611 = vld [vmem:[#allocation7 + $0x28] sm:$0xf]
    %v612 = vld [vmem:[#allocation7 + $0x2c] sm:$0xf]
    %v613 = vld [vmem:[#allocation7 + $0x30] sm:$0xf]
    %v614 = vld [vmem:[#allocation7 + $0x34] sm:$0xf]
    %v615 = vld [vmem:[#allocation7 + $0x38] sm:$0xf]
    %v616 = vld [vmem:[#allocation7 + $0x3c] sm:$0xf]
    %v617 = vld [vmem:[%s4] sm:$0x1]
    %v619 = vperm.slane %v617, 0
    %v637 = vunpack.c.l.b16 %v601
    %v638 = vunpack.c.l.b16 %v602
    %v639 = vunpack.c.l.b16 %v603
    %v640 = vunpack.c.l.b16 %v604
    %v641 = vunpack.c.l.b16 %v605
    %v642 = vunpack.c.l.b16 %v606
    %v643 = vunpack.c.l.b16 %v607
    %v644 = vunpack.c.l.b16 %v608
    %v645 = vunpack.c.l.b16 %v609
    %v646 = vunpack.c.l.b16 %v610
    %v647 = vunpack.c.l.b16 %v611
    %v648 = vunpack.c.l.b16 %v612
    %v649 = vunpack.c.l.b16 %v613
    %v650 = vunpack.c.l.b16 %v614
    %v651 = vunpack.c.l.b16 %v615
    %v652 = vunpack.c.l.b16 %v616
    %v653 = vpack.c.b16 %v638, %v637
    %v654 = vpack.c.b16 %v640, %v639
    %v655 = vpack.c.b16 %v642, %v641
    %v656 = vpack.c.b16 %v644, %v643
    %v657 = vpack.c.b16 %v646, %v645
    %v658 = vpack.c.b16 %v648, %v647
    %v659 = vpack.c.b16 %v650, %v649
    %v660 = vpack.c.b16 %v652, %v651
    %669 = vmatpush.bf16.msra.mxu0 %v660
    %670 = vmatpush.bf16.msra.mxu0 %v659
    %671 = vmatpush.bf16.msra.mxu0 %v658
    %672 = vmatpush.bf16.msra.mxu0 %v657
    %673 = vmatpush.bf16.msra.mxu0 %v656
    %674 = vmatpush.bf16.msra.mxu0 %v655
    %675 = vmatpush.bf16.msra.mxu0 %v654
    %676 = vmatpush.bf16.msra.mxu0 %v653
    %677 = vmatmul.bf16.gmra.mxu0 %v600
    %v678 = vpop.f32.mrf.mxu0
    %v679 = vadd.f32 %v619, %v678
    %v680 = vpop.f32.mrf.mxu0
    %v681 = vadd.f32 %v619, %v680
    %682 = vdwg.mxu0
    %v683 = vmax.f32 %v679, 0.0
    %v684 = vmax.f32 %v681, 0.0
    %v685 = vpack.c.bf16 %v684, %v683
    %v686 = vld [vmem:[#allocation8] sm:$0xf]
    %v687 = vld [vmem:[#allocation8 + $0x4] sm:$0xf]
    %v688 = vld [vmem:[#allocation8 + $0x8] sm:$0xf]
    %v689 = vld [vmem:[#allocation8 + $0xc] sm:$0xf]
    %v690 = vld [vmem:[#allocation8 + $0x10] sm:$0xf]
    %v691 = vld [vmem:[#allocation8 + $0x14] sm:$0xf]
    %v692 = vld [vmem:[#allocation8 + $0x18] sm:$0xf]
    %v693 = vld [vmem:[#allocation8 + $0x1c] sm:$0xf]
    %v694 = vld [vmem:[#allocation8 + $0x20] sm:$0xf]
    %v695 = vld [vmem:[#allocation8 + $0x24] sm:$0xf]
    %v696 = vld [vmem:[#allocation8 + $0x28] sm:$0xf]
    %v697 = vld [vmem:[#allocation8 + $0x2c] sm:$0xf]
    %v698 = vld [vmem:[#allocation8 + $0x30] sm:$0xf]
    %v699 = vld [vmem:[#allocation8 + $0x34] sm:$0xf]
    %v700 = vld [vmem:[#allocation8 + $0x38] sm:$0xf]
    %v701 = vld [vmem:[#allocation8 + $0x3c] sm:$0xf]
    %v702 = vld [vmem:[%s6] sm:$0x1]
    %v704 = vperm.slane %v702, 0
    %v722 = vunpack.c.l.b16 %v686
    %v723 = vunpack.c.l.b16 %v687
    %v724 = vunpack.c.l.b16 %v688
    %v725 = vunpack.c.l.b16 %v689
    %v726 = vunpack.c.l.b16 %v690
    %v727 = vunpack.c.l.b16 %v691
    %v728 = vunpack.c.l.b16 %v692
    %v729 = vunpack.c.l.b16 %v693
    %v730 = vunpack.c.l.b16 %v694
    %v731 = vunpack.c.l.b16 %v695
    %v732 = vunpack.c.l.b16 %v696
    %v733 = vunpack.c.l.b16 %v697
    %v734 = vunpack.c.l.b16 %v698
    %v735 = vunpack.c.l.b16 %v699
    %v736 = vunpack.c.l.b16 %v700
    %v737 = vunpack.c.l.b16 %v701
    %v738 = vpack.c.b16 %v723, %v722
    %v739 = vpack.c.b16 %v725, %v724
    %v740 = vpack.c.b16 %v727, %v726
    %v741 = vpack.c.b16 %v729, %v728
    %v742 = vpack.c.b16 %v731, %v730
    %v743 = vpack.c.b16 %v733, %v732
    %v744 = vpack.c.b16 %v735, %v734
    %v745 = vpack.c.b16 %v737, %v736
    %754 = vmatpush.bf16.msra.mxu0 %v745
    %755 = vmatpush.bf16.msra.mxu0 %v744
    %756 = vmatpush.bf16.msra.mxu0 %v743
    %757 = vmatpush.bf16.msra.mxu0 %v742
    %758 = vmatpush.bf16.msra.mxu0 %v741
    %759 = vmatpush.bf16.msra.mxu0 %v740
    %760 = vmatpush.bf16.msra.mxu0 %v739
    %761 = vmatpush.bf16.msra.mxu0 %v738
    %762 = vmatmul.bf16.gmra.mxu0 %v685
    %v763 = vpop.f32.mrf.mxu0
    %v764 = vadd.f32 %v704, %v763
    %v765 = vpop.f32.mrf.mxu0
    %v766 = vadd.f32 %v704, %v765
    %767 = vdwg.mxu0
    %768 = vst [vmem:[#allocation10] sm:$0xff] %v764
    %769 = vst [vmem:[#allocation10 + $0x8] sm:$0xff] %v766
    // Predicated region
    $region46: #{tpu_custom_call.1} parent=1 // pred_check
      _
    $region47: #{tpu_custom_call.1} parent=1 // pred_check_branch
      %771 = sbr.rel (0) target = $region49
    $region48: #{tpu_custom_call.1} parent=1 // pred_region
      %773 = vsyncadd [#allocation4], 0
      %s774 = sshll.u32 [#allocation10], 4
      %s775 = int_to_ptr.vmem [resolvable:$true] %s774
      %s776 = sshll.u32 %s7, 4
      %s777 = int_to_ptr.hbm [resolvable:$true] %s776
      %782 = dma.vmem_to_hbm [thread:$0]  %s775, 256, %s777, [#allocation4], 128, 128, 8
    $region49: #{tpu_custom_call.1} parent=1 // pred_fallthru
      _
    // Predicated region
    $region50: #{tpu_custom_call.1} parent=1 // pred_check
      _
    $region51: #{tpu_custom_call.1} parent=1 // pred_check_branch
      %784 = sbr.rel (0) target = $region53
    $region52: #{tpu_custom_call.1} parent=1 // pred_region
      %786 = dma.done [#allocation4], 256
    $region53: #{tpu_custom_call.1} parent=1 // pred_fallthru
      _
    %787 = vsyncpa [#allocation3], 1
    %788 = vsyncpa [#allocation6], 1
    %789 = vsyncpa [#allocation9], 1
    %790 = vsyncpa [#allocation4], 1

</llo_original>
